<compile_context>
chip_gen: v6e
topology: v6e:2x2x1
jax: 0.10.0
libtpu: 0.0.40
codegen_flags: <defaults>
</compile_context>

<pallas_src>
import jax
import jax.numpy as jnp
from jax.experimental import pallas as pl
from jax.experimental.pallas import tpu as pltpu

EPS = 1e-8

_SMALL_PARAM_BYTES = 2 << 20      # below this, one gridless call (no pipeline overhead)
_PER_BUFFER_BUDGET = 8 << 20      # target bytes per param tile (double-buffered -> ~16 MiB)
_VMEM_LIMIT_BYTES = 32 << 20      # raise v5e's 16 MiB default; well under v7x's 64 MiB phys
_MIN_GRID_STEPS = 4               # keep multiple parallel steps so v7x's 2 TCs both stream


def cosine_sim_kernel(p_ref, x_ref, o_ref):
    """p_ref: (To, I) row-tile of param; x_ref: (1, I) row vector; o_ref: (To, 1)."""
    p = p_ref[...].astype(jnp.float32)     # (To, I)
    x = x_ref[...].astype(jnp.float32)     # (1, I), broadcasts over rows

    dots = jnp.sum(p * x, axis=-1, keepdims=True)   # (To, 1)
    p_sq = jnp.sum(p * p, axis=-1, keepdims=True)   # (To, 1)
    x_sq = jnp.sum(x * x, axis=-1, keepdims=True)   # (1, 1)

    # rsqrt(max(s, eps^2)) == 1 / max(sqrt(s), eps): eps clamp + EUP rsqrt.
    inv_pn = jax.lax.rsqrt(jnp.maximum(p_sq, EPS * EPS))
    inv_xn = jax.lax.rsqrt(jnp.maximum(x_sq, EPS * EPS))

    o_ref[...] = (dots * (inv_pn * inv_xn)).astype(o_ref.dtype)


def _choose_tile_rows(O, I, itemsize):
    """Largest row tile under the per-buffer byte budget, keeping >=_MIN_GRID_STEPS
    grid steps when O allows it, rows in multiples of 8 (f32 sublane layout)."""
    tile = _PER_BUFFER_BUDGET // max(I * itemsize, 1)
    tile = min(tile, pl.cdiv(O, _MIN_GRID_STEPS))
    tile = max((tile // 8) * 8, 8)
    return min(tile, max((O // 8) * 8, 8))


def mem_forward(param, x):
    """param: (O, I), x: (I,) -> cosine similarities (O,) in float32."""
    O, I = param.shape
    x_row = x.reshape(1, I)
    out_shape = jax.ShapeDtypeStruct((O, 1), jnp.float32)
    itemsize = jnp.dtype(param.dtype).itemsize
    param_bytes = O * I * itemsize

    if param_bytes <= _SMALL_PARAM_BYTES:
        # Small (e.g. 8x32): one gridless call, whole problem in one VMEM block.
        # Dispatch-overhead bound; nothing in-kernel is visible at this size.
        vmem = pl.BlockSpec(memory_space=pltpu.MemorySpace.VMEM)
        out = pl.pallas_call(
            cosine_sim_kernel,
            out_shape=out_shape,
            in_specs=[vmem, vmem],
            out_specs=vmem,
        )(param, x_row)
    else:
        # Large O: stream param in its native (O, I) layout, tiled over rows.
        tile_rows = _choose_tile_rows(O, I, itemsize)
        grid = (pl.cdiv(O, tile_rows),)
        out = pl.pallas_call(
            cosine_sim_kernel,
            out_shape=out_shape,
            grid=grid,
            in_specs=[
                pl.BlockSpec((tile_rows, I), lambda j: (j, 0)),
                pl.BlockSpec((1, I), lambda j: (0, 0)),
            ],
            out_specs=pl.BlockSpec((tile_rows, 1), lambda j: (j, 0)),
            compiler_params=pltpu.CompilerParams(
                dimension_semantics=("parallel",),
                vmem_limit_bytes=_VMEM_LIMIT_BYTES,
            ),
        )(param, x_row)

    return out.reshape(O)


def _reference(param, x):
    # Pure-JAX reference (exact f32 elementwise math, same eps convention).
    pf = param.astype(jnp.float32)
    xf = x.astype(jnp.float32)
    dots = jnp.sum(pf * xf[None, :], axis=1)
    p_norm = jnp.maximum(jnp.sqrt(jnp.sum(pf * pf, axis=1)), EPS)
    x_norm = jnp.maximum(jnp.sqrt(jnp.sum(xf * xf)), EPS)
    return dots / (p_norm * x_norm)


if __name__ == "__main__":
    # Shapes consistent with the module: Mem(input_size=32, output_size=8).
    input_size, output_size = 32, 8
    k_param, k_x = jax.random.split(jax.random.PRNGKey(0))
    param = jax.random.normal(k_param, (output_size, input_size), dtype=jnp.float32)
    x = jax.random.normal(k_x, (input_size,), dtype=jnp.float32)

    o = jax.block_until_ready(mem_forward(param, x))
    assert o.shape == (output_size,)
    assert jnp.allclose(o, _reference(param, x), atol=1e-5, rtol=1e-5)

    # Also exercise the tiled, multi-step "parallel" grid path once, including
    # a ragged (non-multiple-of-tile) last row tile.
    k_pb, k_xb = jax.random.split(jax.random.PRNGKey(1))
    O_big, I_big = 4136, 256   # > _SMALL_PARAM_BYTES, O not a multiple of the tile
    param_big = jax.random.normal(k_pb, (O_big, I_big), dtype=jnp.float32)
    x_big = jax.random.normal(k_xb, (I_big,), dtype=jnp.float32)
    o_big = jax.block_until_ready(mem_forward(param_big, x_big))
    assert o_big.shape == (O_big,)
    assert jnp.allclose(o_big, _reference(param_big, x_big), atol=1e-5, rtol=1e-5)

    print("KERNEL_OK")
</pallas_src>

<mosaic_0001>
module attributes {stable_mosaic.version = 11 : i64} {
  func.func @cosine_sim_kernel(%arg0: memref<8x32xf32, #tpu.memory_space<vmem>>, %arg1: memref<1x32xf32, #tpu.memory_space<vmem>>, %arg2: memref<8x1xf32, #tpu.memory_space<vmem>>) attributes {dimension_semantics = [], scalar_prefetch = 0 : i64, scratch_operands = 0 : i64, tpu.core_type = #tpu.core_type<tc>} {
    %c0 = arith.constant 0 : index
    %c0_0 = arith.constant 0 : index
    %0 = vector.load %arg0[%c0, %c0_0] : memref<8x32xf32, #tpu.memory_space<vmem>>, vector<8x32xf32>
    %c0_1 = arith.constant 0 : index
    %c0_2 = arith.constant 0 : index
    %1 = vector.load %arg1[%c0_1, %c0_2] : memref<1x32xf32, #tpu.memory_space<vmem>>, vector<1x32xf32>
    %2 = vector.broadcast %1 : vector<1x32xf32> to vector<8x32xf32>
    %3 = arith.mulf %0, %2 : vector<8x32xf32>
    %cst = arith.constant dense<0.000000e+00> : vector<8xf32>
    %4 = vector.multi_reduction <add>, %3, %cst [1] : vector<8x32xf32> to vector<8xf32>
    %5 = vector.shape_cast %4 : vector<8xf32> to vector<8x1xf32>
    %6 = arith.mulf %0, %0 : vector<8x32xf32>
    %cst_3 = arith.constant dense<0.000000e+00> : vector<8xf32>
    %7 = vector.multi_reduction <add>, %6, %cst_3 [1] : vector<8x32xf32> to vector<8xf32>
    %8 = vector.shape_cast %7 : vector<8xf32> to vector<8x1xf32>
    %9 = arith.mulf %1, %1 : vector<1x32xf32>
    %cst_4 = arith.constant dense<0.000000e+00> : vector<1xf32>
    %10 = vector.multi_reduction <add>, %9, %cst_4 [1] : vector<1x32xf32> to vector<1xf32>
    %11 = vector.shape_cast %10 : vector<1xf32> to vector<1x1xf32>
    %cst_5 = arith.constant 1.000000e-16 : f32
    %12 = vector.broadcast %cst_5 : f32 to vector<8x1xf32>
    %13 = arith.maximumf %8, %12 : vector<8x1xf32>
    %14 = math.rsqrt %13 : vector<8x1xf32>
    %cst_6 = arith.constant 1.000000e-16 : f32
    %15 = vector.broadcast %cst_6 : f32 to vector<1x1xf32>
    %16 = arith.maximumf %11, %15 : vector<1x1xf32>
    %17 = math.rsqrt %16 : vector<1x1xf32>
    %18 = vector.broadcast %17 : vector<1x1xf32> to vector<8x1xf32>
    %19 = arith.mulf %14, %18 : vector<8x1xf32>
    %20 = arith.mulf %5, %19 : vector<8x1xf32>
    %c0_7 = arith.constant 0 : index
    %c0_8 = arith.constant 0 : index
    %21 = vector.load %arg2[%c0_7, %c0_8] : memref<8x1xf32, #tpu.memory_space<vmem>>, vector<8x1xf32>
    tpu.vector_store %arg2[%c0_7, %c0_8], %20 {strides = array<i32>} : memref<8x1xf32, #tpu.memory_space<vmem>>, vector<8x1xf32>,
    return
  }
}

</mosaic_0001>

<llo_original>
// kernel: tpu_custom_call.1
$region0: #{tpu_custom_call.1}
  #allocation0 [shape = 'u32[]', space=smem, size = 0x4, offset = 0x4, fixed_abs, tag = 'smem constant byte address 0x4 - core index']
  #allocation1 [shape = 'u32[144,128]{1,0:T(1,128)}', space=vmem, size = 0x12000, scoped, tag = 'internal scratch']
  %s0 = inlined_call_operand.hbm [shape: f32[8,32], index: 0, kind: input, shape index: {}]
  %s1 = inlined_call_operand.vmem [shape: f32[1,32], index: 1, kind: input, shape index: {}]
  %s2 = inlined_call_operand.vmem [shape: f32[8,1], index: 2, kind: output, shape index: {}]
  %s3 = sld [smem:[#allocation0]]
  $region22: #{tpu_custom_call.1} parent=0
    _
  %s5 = ssub.s32 1, %s3
  %s6 = scalar_select 0, %s5, %s3
  $region1: #{tpu_custom_call.1} parent=0
    #allocation2 [shape = 'u8[4096]{0}', space=vmem, size = 0x1000, scoped, tag = 'input window, operand 0, single buffered']
    #allocation3 [shape = 's32[1]{0}', space=sflag, size = 0x4, scoped, tag = 'scoped memory for tpu_custom_call.1']
    %7 = vsyncpa [#allocation3], 0
    // Predicated region
    $region2: #{tpu_custom_call.1} parent=1 // pred_check
      _
    $region3: #{tpu_custom_call.1} parent=1 // pred_check_branch
      %9 = sbr.rel (0) target = $region5
    $region4: #{tpu_custom_call.1} parent=1 // pred_region
      %s11 = ssub.s32 128, 128
      %12 = vsyncadd [#allocation3], %s11
      %s14 = sshll.u32 [#allocation2], 4
      %s15 = int_to_ptr.vmem [resolvable:$true] %s14
      %17 = dma.hbm_to_vmem [thread:$0]  %s0, 128, %s15, [#allocation3]
    $region5: #{tpu_custom_call.1} parent=1 // pred_fallthru
      _
    // Predicated region
    $region6: #{tpu_custom_call.1} parent=1 // pred_check
      _
    $region7: #{tpu_custom_call.1} parent=1 // pred_check_branch
      %19 = sbr.rel (0) target = $region9
    $region8: #{tpu_custom_call.1} parent=1 // pred_region
      _
    $region9: #{tpu_custom_call.1} parent=1 // pred_fallthru
      _
    // Predicated region
    $region10: #{tpu_custom_call.1} parent=1 // pred_check
      _
    $region11: #{tpu_custom_call.1} parent=1 // pred_check_branch
      %21 = sbr.rel (0) target = $region13
    $region12: #{tpu_custom_call.1} parent=1 // pred_region
      %22 = dma.done [#allocation3], 128
    $region13: #{tpu_custom_call.1} parent=1 // pred_fallthru
      _
    %v23 = vld [vmem:[#allocation2] sm:$0xff]
    %v24 = vld [vmem:[%s1] sm:$0x1]
    %v26 = vlaneseq
    %v27 = vshrl.u32 %v26, 7
    %v28 = vsub.s32 0, %v27
    %v29 = vrot.slane %v24, %v28
    %v31 = vmul.f32 %v23, %v29
    %vm32 = vcmask 261120
    %v33 = vsel %vm32, %v31, 0.0
    %34 = vadd.xlane.f32.xlu0 %v33
    %v35 = vpop.xlane.xlu0 %34
    %v36 = vmul.f32 %v23, %v23
    %v37 = vsel %vm32, %v36, 0.0
    %38 = vadd.xlane.f32.xlu0 %v37
    %v39 = vpop.xlane.xlu0 %38
    %v40 = vmul.f32 %v24, %v24
    %vm41 = vcmask 253952
    %v42 = vsel %vm41, %v40, 0.0
    %43 = vadd.xlane.f32.xlu0 %v42
    %v44 = vpop.xlane.xlu0 %43
    %v45 = vmax.f32 %v39, 1e-16
    %v46 = vrsqrt.pop %v45
    %v47 = vmax.f32 %v44, 1e-16
    %v48 = vrsqrt.pop %v47
    %v49 = vlaneseq
    %v50 = vshrl.u32 %v49, 7
    %v51 = vsub.s32 0, %v50
    %v52 = vrot.slane %v48, %v51
    %v53 = vmul.f32 %v46, %v52
    %v54 = vmul.f32 %v35, %v53
    %vm55 = vcmask 7168
    %56 = vst.msk [vmem:[%s2] sm:$0xff] %vm55, %v54
    // Predicated region
    $region14: #{tpu_custom_call.1} parent=1 // pred_check
      _
    $region15: #{tpu_custom_call.1} parent=1 // pred_check_branch
      %58 = sbr.rel (0) target = $region17
    $region16: #{tpu_custom_call.1} parent=1 // pred_region
      _
    $region17: #{tpu_custom_call.1} parent=1 // pred_fallthru
      _
    // Predicated region
    $region18: #{tpu_custom_call.1} parent=1 // pred_check
      _
    $region19: #{tpu_custom_call.1} parent=1 // pred_check_branch
      %60 = sbr.rel (0) target = $region21
    $region20: #{tpu_custom_call.1} parent=1 // pred_region
      _
    $region21: #{tpu_custom_call.1} parent=1 // pred_fallthru
      _
    %61 = vsyncpa [#allocation3], 1

</llo_original>
